<compile_context>
chip_gen: v7x
topology: tpu7x:2x2x1
jax: 0.10.0
libtpu: 0.0.40
codegen_flags: <defaults>
</compile_context>

<pallas_src>
import functools

import jax
import jax.numpy as jnp
from jax import lax
from jax.experimental import pallas as pl
from jax.experimental.pallas import tpu as pltpu


_LEAKY_SLOPE = 0.01  # torch.nn.LeakyReLU default negative_slope
_K_PAD = 8           # constant-ones rows appended to x (bias fold); keeps K 8-aligned


def _leaky_relu(x):
    # slope < 1  =>  leaky_relu(x) == max(x, slope * x): 2 VPU ops, no select.
    return jnp.maximum(x, _LEAKY_SLOPE * x)


def _output_layer_kernel(x_ref, w1a_ref, w2bd_ref, b2_ref, o_ref, *,
                         chunk, n_chunks, rows_valid, needs_mask):
    # x_ref:    (B_BLK*C_in, L_BLK)                 flattened input rows
    # w1a_ref:  (B_BLK*inter, B_BLK*C_in + _K_PAD)  block-diag W1 with b1 folded in
    # w2bd_ref: (B_BLK*C_out, B_BLK*inter)          block-diag W2
    # b2_ref:   (B_BLK*C_out, 1)
    # o_ref:    (B_BLK*C_out, L_BLK)                dense output slab
    w1a = w1a_ref[...]
    w2bd = w2bd_ref[...]
    b2 = b2_ref[...]

    rows = x_ref.shape[0]
    # Hoisted constants (JAX does not CSE broadcasts inside the chunk loop).
    ones = jnp.ones((_K_PAD, chunk), dtype=jnp.float32)

    if needs_mask:
        # The last batch block may cover rows past N*C_in; Pallas pads them with
        # undefined data which could contaminate valid rows through the shared matmul
        # (0 * NaN == NaN), so zero them with a NaN-safe select.
        nb = pl.program_id(0)
        row_ids = lax.broadcasted_iota(jnp.int32, (rows, 1), 0) + nb * rows
        row_ok = row_ids < rows_valid  # (rows, 1) bool

    def compute(ci):
        start = pl.multiple_of(ci * chunk, chunk)
        xc = x_ref[:, pl.ds(start, chunk)]                      # (rows, chunk)
        if needs_mask:
            xc = jnp.where(row_ok, xc, 0.0)
        x_aug = jnp.concatenate([xc, ones], axis=0)             # (rows + _K_PAD, chunk)

        # Conv1d(C_in -> inter, k=1) for all B_BLK batches at once, b1 folded in (MXU).
        h = jnp.dot(w1a, x_aug, preferred_element_type=jnp.float32)
        h = _leaky_relu(h)

        # Conv1d(inter -> C_out, k=1) for all batches at once (MXU); tiny b2 add on VPU.
        y = jnp.dot(w2bd, h, preferred_element_type=jnp.float32) + b2

        # network_2: LeakyReLU then Tanh (final_nonlin=True).
        y = jnp.tanh(_leaky_relu(y))
        o_ref[:, pl.ds(start, chunk)] = y.astype(o_ref.dtype)

    if n_chunks == 1:
        compute(0)
    else:
        def body(ci, carry):
            compute(ci)
            return carry
        lax.fori_loop(0, n_chunks, body, 0)


def _round_down(x, m):
    return (x // m) * m


def output_layer_forward(x, w1, b1, w2, b2, *,
                         l_block=16384, l_chunk=2048, b_block=8,
                         vmem_limit_bytes=48 * 1024 * 1024):
    """x: (N, C_in, L) float32. Returns (N, C_out, L) float32."""
    x = x.astype(jnp.float32)
    N, C_in, L = x.shape
    inter = w1.shape[0]
    C_out = w2.shape[0]

    # ---- tile sizes ---------------------------------------------------------
    B_BLK = N if N < b_block else b_block
    needs_mask = (N % B_BLK) != 0

    if L % 128 == 0:
        chunk = min(l_chunk, L)                                # multiple of 128
        l_block_eff = max(chunk, _round_down(l_block, chunk))  # multiple of chunk
        L_BLK = min(l_block_eff, max(chunk, _round_down(L, chunk)))
    else:
        # Rare fallback: a whole-L block keeps the lane-dim layout rule satisfied.
        chunk = L
        L_BLK = L
    n_chunks = L_BLK // chunk

    grid = (pl.cdiv(N, B_BLK), pl.cdiv(L, L_BLK))

    # ---- block-diagonal weights, with b1 folded into the layer-1 matmul -----
    f32 = jnp.float32
    eye = jnp.eye(B_BLK, dtype=f32)
    w1bd = jnp.kron(eye, w1.astype(f32))                       # (B*inter, B*C_in)
    w2bd = jnp.kron(eye, w2.astype(f32))                       # (B*C_out, B*inter)

    # b1 -> two bf16-representable columns (hi + lo), multiplied by the constant-ones
    # rows: the fold is exact to ~1e-6 regardless of the MXU's f32 input handling.
    b1f = b1.astype(f32)
    b1_hi = b1f.astype(jnp.bfloat16).astype(f32)
    b1_lo = (b1f - b1_hi).astype(jnp.bfloat16).astype(f32)
    bias_cols = jnp.zeros((B_BLK * inter, _K_PAD), f32)
    bias_cols = bias_cols.at[:, 0].set(jnp.tile(b1_hi, B_BLK))
    bias_cols = bias_cols.at[:, 1].set(jnp.tile(b1_lo, B_BLK))
    w1a = jnp.concatenate([w1bd, bias_cols], axis=1)           # (B*inter, B*C_in + 8)

    b2t = jnp.tile(b2.astype(f32), B_BLK).reshape(B_BLK * C_out, 1)

    # ---- pallas call ---------------------------------------------------------
    x_flat = x.reshape(N * C_in, L)                            # free reshape
    kernel = functools.partial(
        _output_layer_kernel, chunk=chunk, n_chunks=n_chunks,
        rows_valid=N * C_in, needs_mask=needs_mask)

    cost = pl.CostEstimate(
        flops=2 * N * L * (C_in * inter + inter * C_out),
        transcendentals=N * L * C_out,
        bytes_accessed=4 * N * L * (C_in + C_out),
    )

    out_flat = pl.pallas_call(
        kernel,
        out_shape=jax.ShapeDtypeStruct((N * C_out, L), jnp.float32),
        grid_spec=pltpu.PrefetchScalarGridSpec(
            num_scalar_prefetch=0,
            grid=grid,
            in_specs=[
                pl.BlockSpec((B_BLK * C_in, L_BLK), lambda nb, lb: (nb, lb)),
                pl.BlockSpec(w1a.shape, lambda nb, lb: (0, 0)),
                pl.BlockSpec(w2bd.shape, lambda nb, lb: (0, 0)),
                pl.BlockSpec(b2t.shape, lambda nb, lb: (0, 0)),
            ],
            out_specs=pl.BlockSpec((B_BLK * C_out, L_BLK), lambda nb, lb: (nb, lb)),
        ),
        compiler_params=pltpu.CompilerParams(
            dimension_semantics=("parallel", "parallel"),
            vmem_limit_bytes=vmem_limit_bytes,
        ),
        cost_estimate=cost,
    )(x_flat, w1a, w2bd, b2t)

    # (N*C_out, L) -> (N, C_out, L): free reshape, no transpose / extra HBM pass.
    return out_flat.reshape(N, C_out, L)


def output_layer_reference(x, w1, b1, w2, b2):
    """Pure-JAX reference mirroring the PyTorch forward."""
    h = jnp.einsum("oc,ncl->nol", w1, x) + b1[None, :, None]
    h = jnp.where(h >= 0, h, _LEAKY_SLOPE * h)
    y = jnp.einsum("oc,ncl->nol", w2, h) + b2[None, :, None]
    y = jnp.where(y >= 0, y, _LEAKY_SLOPE * y)
    return jnp.tanh(y)


if __name__ == "__main__":
    # Module hyperparameters: OutputLayer(input_channels=4, intermediate=32,
    # final_nonlin=True, kernel=0, output_channels=1).
    C_in, inter, C_out = 4, 32, 1

    key = jax.random.PRNGKey(0)
    kx1, kx2, kx3, k1, kb1, k2, kb2 = jax.random.split(key, 7)

    w1 = jax.random.normal(k1, (inter, C_in), dtype=jnp.float32) * 0.2
    b1 = jax.random.normal(kb1, (inter,), dtype=jnp.float32) * 0.1
    w2 = jax.random.normal(k2, (C_out, inter), dtype=jnp.float32) * 0.2
    b2 = jax.random.normal(kb2, (C_out,), dtype=jnp.float32) * 0.1

    def check(out, ref, name):
        assert out.shape == ref.shape, name
        err = float(jnp.max(jnp.abs(out - ref)))
        # Expected error is ~1e-6 (bias folded via bf16-exact hi/lo columns, f32
        # accumulation); 5e-3 leaves headroom for MXU default-precision differences
        # across TPU generations while still catching any structural bug.
        assert err < 5e-3, f"{name}: max abs err {err}"

    # Case 1: small single-tile shape (N <= 8, single block, single chunk).
    x1 = jax.random.normal(kx1, (2, C_in, 256), dtype=jnp.float32)
    out1 = jax.block_until_ready(output_layer_forward(x1, w1, b1, w2, b2))
    check(out1, output_layer_reference(x1, w1, b1, w2, b2), "case 1")

    # Case 2: ragged batch (in-kernel mask), multiple L blocks with a padded edge,
    # and in-kernel sub-chunking (small tiles to keep the test shapes small).
    x2 = jax.random.normal(kx2, (10, C_in, 384), dtype=jnp.float32)
    out2 = jax.block_until_ready(
        output_layer_forward(x2, w1, b1, w2, b2, l_block=256, l_chunk=128))
    check(out2, output_layer_reference(x2, w1, b1, w2, b2), "case 2")

    # Case 3: 2x2 grid + 2 chunks per block + ragged batch together.
    x3 = jax.random.normal(kx3, (9, C_in, 2048), dtype=jnp.float32)
    out3 = jax.block_until_ready(
        output_layer_forward(x3, w1, b1, w2, b2, l_block=1024, l_chunk=512))
    check(out3, output_layer_reference(x3, w1, b1, w2, b2), "case 3")

    print("KERNEL_OK")
</pallas_src>

<mosaic_0001>
module attributes {stable_mosaic.version = 11 : i64} {
  func.func @_output_layer_kernel(%arg0: i32, %arg1: i32, %arg2: memref<8x256xf32, #tpu.memory_space<vmem>>, %arg3: memref<64x16xf32, #tpu.memory_space<vmem>>, %arg4: memref<2x64xf32, #tpu.memory_space<vmem>>, %arg5: memref<2x1xf32, #tpu.memory_space<vmem>>, %arg6: memref<2x256xf32, #tpu.memory_space<vmem>>) attributes {dimension_semantics = [#tpu.dimension_semantics<parallel>, #tpu.dimension_semantics<parallel>], iteration_bounds = array<i64: 1, 1>, scalar_prefetch = 0 : i64, scratch_operands = 0 : i64, tpu.core_type = #tpu.core_type<tc>, window_params = [{transform_indices = @transform_0, window_bounds = array<i64: 8, 256>}, {pipeline_mode = #tpu.pipeline_mode<synchronous>, transform_indices = @transform_1, window_bounds = array<i64: 64, 16>}, {pipeline_mode = #tpu.pipeline_mode<synchronous>, transform_indices = @transform_2, window_bounds = array<i64: 2, 64>}, {pipeline_mode = #tpu.pipeline_mode<synchronous>, transform_indices = @transform_3, window_bounds = array<i64: 2, 1>}, {transform_indices = @transform_4, window_bounds = array<i64: 2, 256>}]} {
    %c0 = arith.constant 0 : index
    %c0_0 = arith.constant 0 : index
    %0 = vector.load %arg3[%c0, %c0_0] : memref<64x16xf32, #tpu.memory_space<vmem>>, vector<64x16xf32>
    %c0_1 = arith.constant 0 : index
    %c0_2 = arith.constant 0 : index
    %1 = vector.load %arg4[%c0_1, %c0_2] : memref<2x64xf32, #tpu.memory_space<vmem>>, vector<2x64xf32>
    %c0_3 = arith.constant 0 : index
    %c0_4 = arith.constant 0 : index
    %2 = vector.load %arg5[%c0_3, %c0_4] : memref<2x1xf32, #tpu.memory_space<vmem>>, vector<2x1xf32>
    %cst = arith.constant 1.000000e+00 : f32
    %3 = vector.broadcast %cst : f32 to vector<8x256xf32>
    %c0_i32 = arith.constant 0 : i32
    %4 = tpu.assume_multiple %c0_i32, 256 : i32
    %c0_5 = arith.constant 0 : index
    %5 = arith.index_cast %4 : i32 to index
    %6 = vector.load %arg2[%c0_5, %5] : memref<8x256xf32, #tpu.memory_space<vmem>>, vector<8x256xf32>
    %7 = tpu.concatenate %6, %3 in 0 : vector<8x256xf32>, vector<8x256xf32> -> vector<16x256xf32>
    %cst_6 = arith.constant dense<0.000000e+00> : vector<64x256xf32>
    %8 = tpu.matmul %0, %7, %cst_6 {dimension_numbers = #tpu.dot_dimension_numbers<[1], [0], [0], [1], [0, 0, 1, 1], [], []>} : vector<64x16xf32>, vector<16x256xf32>, vector<64x256xf32> -> vector<64x256xf32>
    %cst_7 = arith.constant 0.00999999977 : f32
    %9 = vector.broadcast %cst_7 : f32 to vector<64x256xf32>
    %10 = arith.mulf %9, %8 : vector<64x256xf32>
    %11 = arith.maximumf %8, %10 : vector<64x256xf32>
    %cst_8 = arith.constant dense<0.000000e+00> : vector<2x256xf32>
    %12 = tpu.matmul %1, %11, %cst_8 {dimension_numbers = #tpu.dot_dimension_numbers<[1], [0], [0], [1], [0, 0, 1, 1], [], []>} : vector<2x64xf32>, vector<64x256xf32>, vector<2x256xf32> -> vector<2x256xf32>
    %13 = vector.broadcast %2 : vector<2x1xf32> to vector<2x256xf32>
    %14 = arith.addf %12, %13 : vector<2x256xf32>
    %cst_9 = arith.constant 0.00999999977 : f32
    %15 = vector.broadcast %cst_9 : f32 to vector<2x256xf32>
    %16 = arith.mulf %15, %14 : vector<2x256xf32>
    %17 = arith.maximumf %14, %16 : vector<2x256xf32>
    %18 = math.tanh %17 : vector<2x256xf32>
    %c0_10 = arith.constant 0 : index
    %19 = arith.index_cast %4 : i32 to index
    %20 = vector.load %arg6[%c0_10, %19] : memref<2x256xf32, #tpu.memory_space<vmem>>, vector<2x256xf32>
    tpu.vector_store %arg6[%c0_10, %19], %18 {strides = array<i32>} : memref<2x256xf32, #tpu.memory_space<vmem>>, vector<2x256xf32>,
    return
  }
  func.func @transform_0(%arg0: i32, %arg1: i32) -> (i32, i32) {
    %c0_i32 = arith.constant 0 : i32
    return %arg0, %arg1 : i32, i32
  }
  func.func @transform_1(%arg0: i32, %arg1: i32) -> (i32, i32) {
    %c0_i32 = arith.constant 0 : i32
    %c0_i32_0 = arith.constant 0 : i32
    %c0_i32_1 = arith.constant 0 : i32
    return %c0_i32, %c0_i32_0 : i32, i32
  }
  func.func @transform_2(%arg0: i32, %arg1: i32) -> (i32, i32) {
    %c0_i32 = arith.constant 0 : i32
    %c0_i32_0 = arith.constant 0 : i32
    %c0_i32_1 = arith.constant 0 : i32
    return %c0_i32, %c0_i32_0 : i32, i32
  }
  func.func @transform_3(%arg0: i32, %arg1: i32) -> (i32, i32) {
    %c0_i32 = arith.constant 0 : i32
    %c0_i32_0 = arith.constant 0 : i32
    %c0_i32_1 = arith.constant 0 : i32
    return %c0_i32, %c0_i32_0 : i32, i32
  }
  func.func @transform_4(%arg0: i32, %arg1: i32) -> (i32, i32) {
    %c0_i32 = arith.constant 0 : i32
    return %arg0, %arg1 : i32, i32
  }
}

</mosaic_0001>

<llo_original>
// kernel: tpu_custom_call.1
$region0: #{tpu_custom_call.1}
  #allocation0 [shape = 'u32[]', space=smem, size = 0x4, offset = 0x4, fixed_abs, tag = 'smem constant byte address 0x4 - core index']
  #allocation1 [shape = 'u32[144,128]{1,0:T(1,128)}', space=vmem, size = 0x12000, scoped, tag = 'internal scratch']
  %s0 = inlined_call_operand.vmem [shape: f32[8,256], index: 0, kind: input, shape index: {}]
  %s1 = inlined_call_operand.vmem [shape: f32[64,16], index: 1, kind: input, shape index: {}]
  %s2 = inlined_call_operand.vmem [shape: f32[2,64], index: 2, kind: input, shape index: {}]
  %s3 = inlined_call_operand.vmem [shape: f32[2,1], index: 3, kind: input, shape index: {}]
  %s4 = inlined_call_operand.hbm [shape: f32[2,256], index: 4, kind: output, shape index: {}]
  %s5 = sld [smem:[#allocation0]]
  $region26: #{tpu_custom_call.1} parent=0
    _
  %s7 = ssub.s32 1, %s5
  %s8 = scalar_select 0, %s7, %s5
  $region1: #{tpu_custom_call.1} parent=0
    #allocation2 [shape = 'u8[2048]{0}', space=vmem, size = 0x800, scoped, tag = 'output window, operand 0, single buffered']
    #allocation3 [shape = 's32[1]{0}', space=sflag, size = 0x4, scoped, tag = 'scoped memory for tpu_custom_call.1']
    %9 = vsyncpa [#allocation3], 0
    // Predicated region
    $region2: #{tpu_custom_call.1} parent=1 // pred_check
      _
    $region3: #{tpu_custom_call.1} parent=1 // pred_check_branch
      %11 = sbr.rel (0) target = $region5
    $region4: #{tpu_custom_call.1} parent=1 // pred_region
      _
    $region5: #{tpu_custom_call.1} parent=1 // pred_fallthru
      _
    // Predicated region
    $region6: #{tpu_custom_call.1} parent=1 // pred_check
      _
    $region7: #{tpu_custom_call.1} parent=1 // pred_check_branch
      %13 = sbr.rel (0) target = $region9
    $region8: #{tpu_custom_call.1} parent=1 // pred_region
      _
    $region9: #{tpu_custom_call.1} parent=1 // pred_fallthru
      _
    // Predicated region
    $region10: #{tpu_custom_call.1} parent=1 // pred_check
      _
    $region11: #{tpu_custom_call.1} parent=1 // pred_check_branch
      %15 = sbr.rel (0) target = $region13
    $region12: #{tpu_custom_call.1} parent=1 // pred_region
      _
    $region13: #{tpu_custom_call.1} parent=1 // pred_fallthru
      _
    // Predicated region
    $region14: #{tpu_custom_call.1} parent=1 // pred_check
      _
    $region15: #{tpu_custom_call.1} parent=1 // pred_check_branch
      %17 = sbr.rel (0) target = $region17
    $region16: #{tpu_custom_call.1} parent=1 // pred_region
      _
    $region17: #{tpu_custom_call.1} parent=1 // pred_fallthru
      _
    %v18 = vld [vmem:[%s1] sm:$0xff]
    %v19 = vld [vmem:[%s1 + $0x8] sm:$0xff]
    %v20 = vld [vmem:[%s1 + $0x10] sm:$0xff]
    %v21 = vld [vmem:[%s1 + $0x18] sm:$0xff]
    %v22 = vld [vmem:[%s1 + $0x20] sm:$0xff]
    %v23 = vld [vmem:[%s1 + $0x28] sm:$0xff]
    %v24 = vld [vmem:[%s1 + $0x30] sm:$0xff]
    %v25 = vld [vmem:[%s1 + $0x38] sm:$0xff]
    %v26 = vld [vmem:[%s2] sm:$0x3]
    %v27 = vld [vmem:[%s3] sm:$0x3]
    %v28 = vld [vmem:[%s0] sm:$0xff]
    %v29 = vld [vmem:[%s0 + $0x8] sm:$0xff]
    %vm30 = vcmask 130048
    %v32 = vsel %vm30, %v18, 0
    %v35 = vsel %vm30, %v19, 0
    %v38 = vsel %vm30, %v20, 0
    %v41 = vsel %vm30, %v21, 0
    %v44 = vsel %vm30, %v22, 0
    %v47 = vsel %vm30, %v23, 0
    %v50 = vsel %vm30, %v24, 0
    %v53 = vsel %vm30, %v25, 0
    %55 = vmatprep.subr.mxu0 %v29
    %56 = vmatpush1.msra.mxu0 %v28
    %57 = vmatprep.subr.mxu0 1.0
    %58 = vmatpush1.msra.mxu0 1.0
    %59 = vmatprep.subr.mxu0 0.0
    %60 = vmatpush1.msra.mxu0 0.0
    %61 = vmatprep.subr.mxu0 0.0
    %62 = vmatpush1.msra.mxu0 0.0
    %63 = vmatprep.subr.mxu0 0.0
    %64 = vmatpush1.msra.mxu0 0.0
    %65 = vmatprep.subr.mxu0 0.0
    %66 = vmatpush1.msra.mxu0 0.0
    %67 = vmatprep.subr.mxu0 0.0
    %68 = vmatpush1.msra.mxu0 0.0
    %69 = vmatprep.subr.mxu0 0.0
    %70 = vmatpush1.msra.mxu0 0.0
    %71 = vmatprep.subr.mxu0 0.0
    %72 = vmatpush1.msra.mxu0 0.0
    %73 = vmatprep.subr.mxu0 0.0
    %74 = vmatpush1.msra.mxu0 0.0
    %75 = vmatprep.subr.mxu0 0.0
    %76 = vmatpush1.msra.mxu0 0.0
    %77 = vmatprep.subr.mxu0 0.0
    %78 = vmatpush1.msra.mxu0 0.0
    %79 = vmatprep.subr.mxu0 0.0
    %80 = vmatpush1.msra.mxu0 0.0
    %81 = vmatprep.subr.mxu0 0.0
    %82 = vmatpush1.msra.mxu0 0.0
    %83 = vmatprep.subr.mxu0 0.0
    %84 = vmatpush1.msra.mxu0 0.0
    %85 = vmatprep.subr.mxu0 0.0
    %86 = vmatpush1.msra.mxu0 0.0
    %87 = vmatprep.subr.mxu0 0.0
    %88 = vmatpush1.msra.mxu0 0.0
    %89 = vmatprep.subr.mxu0 0.0
    %90 = vmatpush1.msra.mxu0 0.0
    %91 = vmatprep.subr.mxu0 0.0
    %92 = vmatpush1.msra.mxu0 0.0
    %93 = vmatprep.subr.mxu0 0.0
    %94 = vmatpush1.msra.mxu0 0.0
    %95 = vmatprep.subr.mxu0 0.0
    %96 = vmatpush1.msra.mxu0 0.0
    %97 = vmatprep.subr.mxu0 0.0
    %98 = vmatpush1.msra.mxu0 0.0
    %99 = vmatprep.subr.mxu0 0.0
    %100 = vmatpush1.msra.mxu0 0.0
    %101 = vmatprep.subr.mxu0 0.0
    %102 = vmatpush1.msra.mxu0 0.0
    %103 = vmatprep.subr.mxu0 0.0
    %104 = vmatpush1.msra.mxu0 0.0
    %105 = vmatprep.subr.mxu0 0.0
    %106 = vmatpush1.msra.mxu0 0.0
    %107 = vmatprep.subr.mxu0 0.0
    %108 = vmatpush1.msra.mxu0 0.0
    %109 = vmatprep.subr.mxu0 0.0
    %110 = vmatpush1.msra.mxu0 0.0
    %111 = vmatprep.subr.mxu0 0.0
    %112 = vmatpush1.msra.mxu0 0.0
    %113 = vmatprep.subr.mxu0 0.0
    %114 = vmatpush1.msra.mxu0 0.0
    %115 = vmatprep.subr.mxu0 0.0
    %116 = vmatpush1.msra.mxu0 0.0
    %117 = vmatprep.subr.mxu0 0.0
    %118 = vmatpush1.msra.mxu0 0.0
    %119 = vmatprep.mubr.f32.mxu0 0.0
    %120 = vmatmul.mubr.f32.gmra.mrb[0].mxu0 %v32
    %v121 = vpop.f32.mrb[0].mxu0
    %v122 = vadd.f32 0.0, %v121
    %v123 = vpop.f32.mrb[0].mxu0
    %v124 = vadd.f32 0.0, %v123
    %125 = vmatprep.mubr.f32.mxu0 0.0
    %126 = vmatmul.mubr.f32.gmra.mrb[0].mxu0 %v35
    %v127 = vpop.f32.mrb[0].mxu0
    %v128 = vadd.f32 0.0, %v127
    %v129 = vpop.f32.mrb[0].mxu0
    %v130 = vadd.f32 0.0, %v129
    %131 = vmatprep.mubr.f32.mxu0 0.0
    %132 = vmatmul.mubr.f32.gmra.mrb[0].mxu0 %v38
    %v133 = vpop.f32.mrb[0].mxu0
    %v134 = vadd.f32 0.0, %v133
    %v135 = vpop.f32.mrb[0].mxu0
    %v136 = vadd.f32 0.0, %v135
    %137 = vmatprep.mubr.f32.mxu0 0.0
    %138 = vmatmul.mubr.f32.gmra.mrb[0].mxu0 %v41
    %v139 = vpop.f32.mrb[0].mxu0
    %v140 = vadd.f32 0.0, %v139
    %v141 = vpop.f32.mrb[0].mxu0
    %v142 = vadd.f32 0.0, %v141
    %143 = vmatprep.mubr.f32.mxu0 0.0
    %144 = vmatmul.mubr.f32.gmra.mrb[0].mxu0 %v44
    %v145 = vpop.f32.mrb[0].mxu0
    %v146 = vadd.f32 0.0, %v145
    %v147 = vpop.f32.mrb[0].mxu0
    %v148 = vadd.f32 0.0, %v147
    %149 = vmatprep.mubr.f32.mxu0 0.0
    %150 = vmatmul.mubr.f32.gmra.mrb[0].mxu0 %v47
    %v151 = vpop.f32.mrb[0].mxu0
    %v152 = vadd.f32 0.0, %v151
    %v153 = vpop.f32.mrb[0].mxu0
    %v154 = vadd.f32 0.0, %v153
    %155 = vmatprep.mubr.f32.mxu0 0.0
    %156 = vmatmul.mubr.f32.gmra.mrb[0].mxu0 %v50
    %v157 = vpop.f32.mrb[0].mxu0
    %v158 = vadd.f32 0.0, %v157
    %v159 = vpop.f32.mrb[0].mxu0
    %v160 = vadd.f32 0.0, %v159
    %161 = vmatprep.mubr.f32.mxu0 0.0
    %162 = vmatmul.mubr.f32.gmra.mrb[0].mxu0 %v53
    %v163 = vpop.f32.mrb[0].mxu0
    %v164 = vadd.f32 0.0, %v163
    %v165 = vpop.f32.mrb[0].mxu0
    %v166 = vadd.f32 0.0, %v165
    %167 = vdwg.mxu0
    %v168 = vmul.f32 %v122, 0.01
    %v169 = vmul.f32 %v124, 0.01
    %v170 = vmul.f32 %v128, 0.01
    %v171 = vmul.f32 %v130, 0.01
    %v172 = vmul.f32 %v134, 0.01
    %v173 = vmul.f32 %v136, 0.01
    %v174 = vmul.f32 %v140, 0.01
    %v175 = vmul.f32 %v142, 0.01
    %v176 = vmul.f32 %v146, 0.01
    %v177 = vmul.f32 %v148, 0.01
    %v178 = vmul.f32 %v152, 0.01
    %v179 = vmul.f32 %v154, 0.01
    %v180 = vmul.f32 %v158, 0.01
    %v181 = vmul.f32 %v160, 0.01
    %v182 = vmul.f32 %v164, 0.01
    %v183 = vmul.f32 %v166, 0.01
    %v184 = vmax.f32 %v122, %v168
    %v185 = vmax.f32 %v124, %v169
    %v186 = vmax.f32 %v128, %v170
    %v187 = vmax.f32 %v130, %v171
    %v188 = vmax.f32 %v134, %v172
    %v189 = vmax.f32 %v136, %v173
    %v190 = vmax.f32 %v140, %v174
    %v191 = vmax.f32 %v142, %v175
    %v192 = vmax.f32 %v146, %v176
    %v193 = vmax.f32 %v148, %v177
    %v194 = vmax.f32 %v152, %v178
    %v195 = vmax.f32 %v154, %v179
    %v196 = vmax.f32 %v158, %v180
    %v197 = vmax.f32 %v160, %v181
    %v198 = vmax.f32 %v164, %v182
    %v199 = vmax.f32 %v166, %v183
    %201 = vset.pattern.permute.xlu0 0
    %202 = vperm.xlu0 %201, %v27
    %v203 = vpop.permute.xlu0 %202
    %vm205 = vcmask 523264
    %v207 = vsel %vm205, %v26, 0
    %209 = vmatprep.subr.mxu0 %v185
    %210 = vmatpush1.msra.mxu0 %v184
    %211 = vmatprep.subr.mxu0 %v187
    %212 = vmatpush1.msra.mxu0 %v186
    %213 = vmatprep.subr.mxu0 %v189
    %214 = vmatpush1.msra.mxu0 %v188
    %215 = vmatprep.subr.mxu0 %v191
    %216 = vmatpush1.msra.mxu0 %v190
    %217 = vmatprep.subr.mxu0 %v193
    %218 = vmatpush1.msra.mxu0 %v192
    %219 = vmatprep.subr.mxu0 %v195
    %220 = vmatpush1.msra.mxu0 %v194
    %221 = vmatprep.subr.mxu0 %v197
    %222 = vmatpush1.msra.mxu0 %v196
    %223 = vmatprep.subr.mxu0 %v199
    %224 = vmatpush1.msra.mxu0 %v198
    %225 = vmatprep.subr.mxu0 0.0
    %226 = vmatpush1.msra.mxu0 0.0
    %227 = vmatprep.subr.mxu0 0.0
    %228 = vmatpush1.msra.mxu0 0.0
    %229 = vmatprep.subr.mxu0 0.0
    %230 = vmatpush1.msra.mxu0 0.0
    %231 = vmatprep.subr.mxu0 0.0
    %232 = vmatpush1.msra.mxu0 0.0
    %233 = vmatprep.subr.mxu0 0.0
    %234 = vmatpush1.msra.mxu0 0.0
    %235 = vmatprep.subr.mxu0 0.0
    %236 = vmatpush1.msra.mxu0 0.0
    %237 = vmatprep.subr.mxu0 0.0
    %238 = vmatpush1.msra.mxu0 0.0
    %239 = vmatprep.subr.mxu0 0.0
    %240 = vmatpush1.msra.mxu0 0.0
    %241 = vmatprep.subr.mxu0 0.0
    %242 = vmatpush1.msra.mxu0 0.0
    %243 = vmatprep.subr.mxu0 0.0
    %244 = vmatpush1.msra.mxu0 0.0
    %245 = vmatprep.subr.mxu0 0.0
    %246 = vmatpush1.msra.mxu0 0.0
    %247 = vmatprep.subr.mxu0 0.0
    %248 = vmatpush1.msra.mxu0 0.0
    %249 = vmatprep.subr.mxu0 0.0
    %250 = vmatpush1.msra.mxu0 0.0
    %251 = vmatprep.subr.mxu0 0.0
    %252 = vmatpush1.msra.mxu0 0.0
    %253 = vmatprep.subr.mxu0 0.0
    %254 = vmatpush1.msra.mxu0 0.0
    %255 = vmatprep.subr.mxu0 0.0
    %256 = vmatpush1.msra.mxu0 0.0
    %257 = vmatprep.subr.mxu0 0.0
    %258 = vmatpush1.msra.mxu0 0.0
    %259 = vmatprep.subr.mxu0 0.0
    %260 = vmatpush1.msra.mxu0 0.0
    %261 = vmatprep.subr.mxu0 0.0
    %262 = vmatpush1.msra.mxu0 0.0
    %263 = vmatprep.subr.mxu0 0.0
    %264 = vmatpush1.msra.mxu0 0.0
    %265 = vmatprep.subr.mxu0 0.0
    %266 = vmatpush1.msra.mxu0 0.0
    %267 = vmatprep.subr.mxu0 0.0
    %268 = vmatpush1.msra.mxu0 0.0
    %269 = vmatprep.subr.mxu0 0.0
    %270 = vmatpush1.msra.mxu0 0.0
    %271 = vmatprep.subr.mxu0 0.0
    %272 = vmatpush1.msra.mxu0 0.0
    %273 = vmatprep.mubr.f32.mxu0 0.0
    %274 = vmatmul.mubr.f32.gmra.mrb[0].mxu0 %v207
    %v275 = vpop.f32.mrb[0].mxu0
    %v276 = vadd.f32 %v203, %v275
    %v277 = vpop.f32.mrb[0].mxu0
    %v278 = vadd.f32 %v203, %v277
    %279 = vdwg.mxu0
    %v280 = vmul.f32 %v276, 0.01
    %v281 = vmul.f32 %v278, 0.01
    %v282 = vmax.f32 %v276, %v280
    %v283 = vmax.f32 %v278, %v281
    %v284 = vtanh.pop %v282
    %v285 = vtanh.pop %v283
    %v288 = vcombine.low %v284, %v285
    %v290 = vunpack.c.l.s4 1983009808
    %v291 = vunpack.c.0.s8 %v290
    %v292 = vlaneseq
    %v293 = vshrl.u32 %v292, 7
    %v294 = vsub.s32 %v291, %v293
    %v295 = vrot.slane %v288, %v294
    %297 = vst [vmem:[#allocation2] sm:$0xf] %v295
    // Predicated region
    $region18: #{tpu_custom_call.1} parent=1 // pred_check
      _
    $region19: #{tpu_custom_call.1} parent=1 // pred_check_branch
      %299 = sbr.rel (0) target = $region21
    $region20: #{tpu_custom_call.1} parent=1 // pred_region
      %s301 = ssub.s32 64, 64
      %302 = vsyncadd [#allocation3], %s301
      %s304 = sshll.u32 [#allocation2], 4
      %s305 = int_to_ptr.vmem [resolvable:$true] %s304
      %307 = dma.vmem_to_hbm [thread:$0]  %s305, 64, %s4, [#allocation3]
    $region21: #{tpu_custom_call.1} parent=1 // pred_fallthru
      _
    // Predicated region
    $region22: #{tpu_custom_call.1} parent=1 // pred_check
      _
    $region23: #{tpu_custom_call.1} parent=1 // pred_check_branch
      %309 = sbr.rel (0) target = $region25
    $region24: #{tpu_custom_call.1} parent=1 // pred_region
      %310 = dma.done [#allocation3], 64
    $region25: #{tpu_custom_call.1} parent=1 // pred_fallthru
      _
    %311 = vsyncpa [#allocation3], 1

</llo_original>
